<compile_context>
chip_gen: v5e
topology: v5e:2x2
jax: 0.10.0
libtpu: 0.0.40
codegen_flags: <defaults>
</compile_context>

<pallas_src>
import jax
import jax.numpy as jnp
from jax.experimental import pallas as pl
from jax.experimental.pallas import tpu as pltpu

IN_DIM = 10 * 20   # 200
H1 = 256
H2 = 128
OUT_DIM = 4
OUT_PAD = 128      # lane-dense output slab width (unmasked vst)
MAX_TM = 2048      # max batch tile (safe on v5e/v6e/v7x with the vmem limit below)


def _round_up(n, m):
    return ((n + m - 1) // m) * m


def _cdiv(a, b):
    return -(-a // b)


def _choose_tile(batch, max_tm):
    """Pick (tm, b_pad) so that b_pad % tm == 0 and the grid has >= 2 steps for B > 8.

    >= 2 steps keeps both v7x TensorCores busy ("parallel" batch axis) and gives the
    double-buffered pipeline something to overlap; steps are sized to avoid excessive
    batch padding while capping the tile at max_tm.
    """
    b8 = _round_up(max(batch, 1), 8)
    if b8 <= 8:
        return 8, 8
    steps = max(2, _cdiv(b8, max_tm))
    tm = min(max_tm, _round_up(_cdiv(b8, steps), 8))
    b_pad = tm * steps
    return tm, b_pad


def tetris_mlp_kernel(x_ref, w1_ref, b1_ref, w2_ref, b2_ref, w3_ref, b3_ref,
                      o_ref):
    # In-kernel cast of the board tile (works for f32 / int8 / bool inputs); free VPU
    # op, keeps the bf16 MXU path.
    x = x_ref[...].astype(jnp.bfloat16)
    # fc1: bf16 MXU matmul, f32 accumulate; bias + ReLU in f32 (v5e has no bf16 VPU).
    h1 = jnp.dot(x, w1_ref[...],
                 preferred_element_type=jnp.float32) + b1_ref[...]
    h1 = jnp.maximum(h1, 0.0).astype(jnp.bfloat16)
    # fc2
    h2 = jnp.dot(h1, w2_ref[...],
                 preferred_element_type=jnp.float32) + b2_ref[...]
    h2 = jnp.maximum(h2, 0.0).astype(jnp.bfloat16)
    # fc3 (output padded to 128 lanes -> unmasked lane-dense stores); bf16 writeback.
    o_ref[...] = (jnp.dot(h2, w3_ref[...],
                          preferred_element_type=jnp.float32)
                  + b3_ref[...]).astype(o_ref.dtype)


def prepare_params(params):
    """One-time weight prep (bf16 casts, pad fc3 to 128 output lanes). Hoisted out of
    the forward so it isn't re-executed as extra XLA ops on every call."""
    return {
        "w1": params["w1"].astype(jnp.bfloat16),
        "b1": params["b1"].astype(jnp.float32),
        "w2": params["w2"].astype(jnp.bfloat16),
        "b2": params["b2"].astype(jnp.float32),
        "w3": jnp.pad(params["w3"],
                      ((0, 0), (0, OUT_PAD - OUT_DIM))).astype(jnp.bfloat16),
        "b3": jnp.pad(params["b3"].astype(jnp.float32),
                      ((0, 0), (0, OUT_PAD - OUT_DIM))),
    }


def tetris_net_forward(x, prep, *, max_tm=MAX_TM):
    """x: (B, 200) float32 (or int8/uint8/bool board).  prep: prepare_params(...) output.
    Returns (B, 4) float32."""
    B = x.shape[0]
    tm, b_pad = _choose_tile(B, max_tm)
    if b_pad != B:
        x = jnp.pad(x, ((0, b_pad - B), (0, 0)))

    out = pl.pallas_call(
        tetris_mlp_kernel,
        out_shape=jax.ShapeDtypeStruct((b_pad, OUT_PAD), jnp.bfloat16),
        grid_spec=pltpu.PrefetchScalarGridSpec(
            num_scalar_prefetch=0,
            grid=(b_pad // tm,),
            in_specs=[
                pl.BlockSpec((tm, IN_DIM), lambda i: (i, 0)),   # x: pipelined tile
                pl.BlockSpec((IN_DIM, H1), lambda i: (0, 0)),   # weights/biases:
                pl.BlockSpec((1, H1),      lambda i: (0, 0)),   # constant index_map
                pl.BlockSpec((H1, H2),     lambda i: (0, 0)),   # -> DMA'd once,
                pl.BlockSpec((1, H2),      lambda i: (0, 0)),   # VMEM-resident
                pl.BlockSpec((H2, OUT_PAD), lambda i: (0, 0)),
                pl.BlockSpec((1, OUT_PAD),  lambda i: (0, 0)),
            ],
            out_specs=pl.BlockSpec((tm, OUT_PAD), lambda i: (i, 0)),
        ),
        compiler_params=pltpu.CompilerParams(
            dimension_semantics=("parallel",),      # megacore-shard batch on v7x
            vmem_limit_bytes=32 * 1024 * 1024,      # explicit headroom (v5e default is 16 MiB)
        ),
    )(x, prep["w1"], prep["b1"], prep["w2"], prep["b2"], prep["w3"], prep["b3"])
    # Padded rows are garbage (ReLU(b1) propagated) -> always slice [:B].
    return out[:B, :OUT_DIM].astype(jnp.float32)


def init_params(key):
    """Deterministic init mimicking nn.Linear's U(-1/sqrt(fan_in), +1/sqrt(fan_in))."""
    ks = jax.random.split(key, 6)

    def linear(kw, kb, fan_in, fan_out):
        bound = 1.0 / jnp.sqrt(float(fan_in))
        w = jax.random.uniform(kw, (fan_in, fan_out), jnp.float32,
                               minval=-bound, maxval=bound)
        b = jax.random.uniform(kb, (1, fan_out), jnp.float32,
                               minval=-bound, maxval=bound)
        return w, b

    w1, b1 = linear(ks[0], ks[1], IN_DIM, H1)
    w2, b2 = linear(ks[2], ks[3], H1, H2)
    w3, b3 = linear(ks[4], ks[5], H2, OUT_DIM)
    return {"w1": w1, "b1": b1, "w2": w2, "b2": b2, "w3": w3, "b3": b3}


def reference_forward(x, p):
    h1 = jnp.maximum(x @ p["w1"] + p["b1"], 0.0)
    h2 = jnp.maximum(h1 @ p["w2"] + p["b2"], 0.0)
    return h2 @ p["w3"] + p["b3"]


if __name__ == "__main__":
    key = jax.random.PRNGKey(0)
    k_x, k_p = jax.random.split(key)

    # Small demo batch (grid = 2 steps -> exercises the pipelined / megacore path).
    batch = 128
    x = jax.random.bernoulli(k_x, 0.3, (batch, IN_DIM)).astype(jnp.float32)
    params = init_params(k_p)
    prep = prepare_params(params)            # weight prep done once, reused per call

    out = tetris_net_forward(x, prep)
    out = jax.block_until_ready(out)

    ref = reference_forward(x, params)
    assert out.shape == (batch, OUT_DIM), out.shape
    # bf16 matmul/output path vs f32 reference -> loose tolerance.
    max_err = jnp.max(jnp.abs(out - ref))
    assert jnp.allclose(out, ref, atol=5e-2, rtol=5e-2), f"max err {max_err}"

    print("KERNEL_OK")
</pallas_src>

<mosaic_0001>
module attributes {stable_mosaic.version = 11 : i64} {
  func.func @tetris_mlp_kernel(%arg0: i32, %arg1: memref<64x200xf32, #tpu.memory_space<vmem>>, %arg2: memref<200x256xbf16, #tpu.memory_space<vmem>>, %arg3: memref<1x256xf32, #tpu.memory_space<vmem>>, %arg4: memref<256x128xbf16, #tpu.memory_space<vmem>>, %arg5: memref<1x128xf32, #tpu.memory_space<vmem>>, %arg6: memref<128x128xbf16, #tpu.memory_space<vmem>>, %arg7: memref<1x128xf32, #tpu.memory_space<vmem>>, %arg8: memref<64x128xbf16, #tpu.memory_space<vmem>>) attributes {dimension_semantics = [#tpu.dimension_semantics<parallel>], iteration_bounds = array<i64: 2>, scalar_prefetch = 0 : i64, scratch_operands = 0 : i64, tpu.core_type = #tpu.core_type<tc>, window_params = [{transform_indices = @transform_0, window_bounds = array<i64: 64, 200>}, {pipeline_mode = #tpu.pipeline_mode<synchronous>, transform_indices = @transform_1, window_bounds = array<i64: 200, 256>}, {pipeline_mode = #tpu.pipeline_mode<synchronous>, transform_indices = @transform_2, window_bounds = array<i64: 1, 256>}, {pipeline_mode = #tpu.pipeline_mode<synchronous>, transform_indices = @transform_3, window_bounds = array<i64: 256, 128>}, {pipeline_mode = #tpu.pipeline_mode<synchronous>, transform_indices = @transform_4, window_bounds = array<i64: 1, 128>}, {pipeline_mode = #tpu.pipeline_mode<synchronous>, transform_indices = @transform_5, window_bounds = array<i64: 128, 128>}, {pipeline_mode = #tpu.pipeline_mode<synchronous>, transform_indices = @transform_6, window_bounds = array<i64: 1, 128>}, {transform_indices = @transform_7, window_bounds = array<i64: 64, 128>}]} {
    %c0 = arith.constant 0 : index
    %c0_0 = arith.constant 0 : index
    %0 = vector.load %arg1[%c0, %c0_0] : memref<64x200xf32, #tpu.memory_space<vmem>>, vector<64x200xf32>
    %1 = arith.truncf %0 : vector<64x200xf32> to vector<64x200xbf16>
    %c0_1 = arith.constant 0 : index
    %c0_2 = arith.constant 0 : index
    %2 = vector.load %arg2[%c0_1, %c0_2] : memref<200x256xbf16, #tpu.memory_space<vmem>>, vector<200x256xbf16>
    %cst = arith.constant dense<0.000000e+00> : vector<64x256xf32>
    %3 = tpu.matmul %1, %2, %cst {dimension_numbers = #tpu.dot_dimension_numbers<[1], [0], [0], [1], [0, 0, 1, 1], [], []>} : vector<64x200xbf16>, vector<200x256xbf16>, vector<64x256xf32> -> vector<64x256xf32>
    %c0_3 = arith.constant 0 : index
    %c0_4 = arith.constant 0 : index
    %4 = vector.load %arg3[%c0_3, %c0_4] : memref<1x256xf32, #tpu.memory_space<vmem>>, vector<1x256xf32>
    %5 = vector.broadcast %4 : vector<1x256xf32> to vector<64x256xf32>
    %6 = arith.addf %3, %5 : vector<64x256xf32>
    %cst_5 = arith.constant 0.000000e+00 : f32
    %7 = vector.broadcast %cst_5 : f32 to vector<64x256xf32>
    %8 = arith.maximumf %6, %7 : vector<64x256xf32>
    %9 = arith.truncf %8 : vector<64x256xf32> to vector<64x256xbf16>
    %c0_6 = arith.constant 0 : index
    %c0_7 = arith.constant 0 : index
    %10 = vector.load %arg4[%c0_6, %c0_7] : memref<256x128xbf16, #tpu.memory_space<vmem>>, vector<256x128xbf16>
    %cst_8 = arith.constant dense<0.000000e+00> : vector<64x128xf32>
    %11 = tpu.matmul %9, %10, %cst_8 {dimension_numbers = #tpu.dot_dimension_numbers<[1], [0], [0], [1], [0, 0, 1, 1], [], []>} : vector<64x256xbf16>, vector<256x128xbf16>, vector<64x128xf32> -> vector<64x128xf32>
    %c0_9 = arith.constant 0 : index
    %c0_10 = arith.constant 0 : index
    %12 = vector.load %arg5[%c0_9, %c0_10] : memref<1x128xf32, #tpu.memory_space<vmem>>, vector<1x128xf32>
    %13 = vector.broadcast %12 : vector<1x128xf32> to vector<64x128xf32>
    %14 = arith.addf %11, %13 : vector<64x128xf32>
    %cst_11 = arith.constant 0.000000e+00 : f32
    %15 = vector.broadcast %cst_11 : f32 to vector<64x128xf32>
    %16 = arith.maximumf %14, %15 : vector<64x128xf32>
    %17 = arith.truncf %16 : vector<64x128xf32> to vector<64x128xbf16>
    %c0_12 = arith.constant 0 : index
    %c0_13 = arith.constant 0 : index
    %18 = vector.load %arg6[%c0_12, %c0_13] : memref<128x128xbf16, #tpu.memory_space<vmem>>, vector<128x128xbf16>
    %cst_14 = arith.constant dense<0.000000e+00> : vector<64x128xf32>
    %19 = tpu.matmul %17, %18, %cst_14 {dimension_numbers = #tpu.dot_dimension_numbers<[1], [0], [0], [1], [0, 0, 1, 1], [], []>} : vector<64x128xbf16>, vector<128x128xbf16>, vector<64x128xf32> -> vector<64x128xf32>
    %c0_15 = arith.constant 0 : index
    %c0_16 = arith.constant 0 : index
    %20 = vector.load %arg7[%c0_15, %c0_16] : memref<1x128xf32, #tpu.memory_space<vmem>>, vector<1x128xf32>
    %21 = vector.broadcast %20 : vector<1x128xf32> to vector<64x128xf32>
    %22 = arith.addf %19, %21 : vector<64x128xf32>
    %23 = arith.truncf %22 : vector<64x128xf32> to vector<64x128xbf16>
    %c0_17 = arith.constant 0 : index
    %c0_18 = arith.constant 0 : index
    %24 = vector.load %arg8[%c0_17, %c0_18] : memref<64x128xbf16, #tpu.memory_space<vmem>>, vector<64x128xbf16>
    tpu.vector_store %arg8[%c0_17, %c0_18], %23 {strides = array<i32>} : memref<64x128xbf16, #tpu.memory_space<vmem>>, vector<64x128xbf16>,
    return
  }
  func.func @transform_0(%arg0: i32) -> (i32, i32) {
    %c0_i32 = arith.constant 0 : i32
    %c0_i32_0 = arith.constant 0 : i32
    return %arg0, %c0_i32 : i32, i32
  }
  func.func @transform_1(%arg0: i32) -> (i32, i32) {
    %c0_i32 = arith.constant 0 : i32
    %c0_i32_0 = arith.constant 0 : i32
    %c0_i32_1 = arith.constant 0 : i32
    return %c0_i32, %c0_i32_0 : i32, i32
  }
  func.func @transform_2(%arg0: i32) -> (i32, i32) {
    %c0_i32 = arith.constant 0 : i32
    %c0_i32_0 = arith.constant 0 : i32
    %c0_i32_1 = arith.constant 0 : i32
    return %c0_i32, %c0_i32_0 : i32, i32
  }
  func.func @transform_3(%arg0: i32) -> (i32, i32) {
    %c0_i32 = arith.constant 0 : i32
    %c0_i32_0 = arith.constant 0 : i32
    %c0_i32_1 = arith.constant 0 : i32
    return %c0_i32, %c0_i32_0 : i32, i32
  }
  func.func @transform_4(%arg0: i32) -> (i32, i32) {
    %c0_i32 = arith.constant 0 : i32
    %c0_i32_0 = arith.constant 0 : i32
    %c0_i32_1 = arith.constant 0 : i32
    return %c0_i32, %c0_i32_0 : i32, i32
  }
  func.func @transform_5(%arg0: i32) -> (i32, i32) {
    %c0_i32 = arith.constant 0 : i32
    %c0_i32_0 = arith.constant 0 : i32
    %c0_i32_1 = arith.constant 0 : i32
    return %c0_i32, %c0_i32_0 : i32, i32
  }
  func.func @transform_6(%arg0: i32) -> (i32, i32) {
    %c0_i32 = arith.constant 0 : i32
    %c0_i32_0 = arith.constant 0 : i32
    %c0_i32_1 = arith.constant 0 : i32
    return %c0_i32, %c0_i32_0 : i32, i32
  }
  func.func @transform_7(%arg0: i32) -> (i32, i32) {
    %c0_i32 = arith.constant 0 : i32
    %c0_i32_0 = arith.constant 0 : i32
    return %arg0, %c0_i32 : i32, i32
  }
}

</mosaic_0001>

<llo_original>
// kernel: tpu_custom_call.1
$region0: #{tpu_custom_call.1}
  #allocation0 [shape = 'u32[]', space=smem, size = 0x4, offset = 0x4, fixed_abs, tag = 'smem constant byte address 0x4 - core index']
  #allocation1 [shape = 'u32[72,128]{1,0:T(1,128)}', space=vmem, size = 0x9000, scoped, tag = 'internal scratch']
  %s0 = inlined_call_operand.vmem [shape: f32[128,200], index: 0, kind: input, shape index: {}]
  %s1 = inlined_call_operand.vmem [shape: bf16[200,256], index: 1, kind: input, shape index: {}]
  %s2 = inlined_call_operand.vmem [shape: f32[1,256], index: 2, kind: input, shape index: {}]
  %s3 = inlined_call_operand.vmem [shape: bf16[256,128], index: 3, kind: input, shape index: {}]
  %s4 = inlined_call_operand.vmem [shape: f32[1,128], index: 4, kind: input, shape index: {}]
  %s5 = inlined_call_operand.vmem [shape: bf16[128,128], index: 5, kind: input, shape index: {}]
  %s6 = inlined_call_operand.vmem [shape: f32[1,128], index: 6, kind: input, shape index: {}]
  %s7 = inlined_call_operand.hbm [shape: bf16[128,128], index: 7, kind: output, shape index: {}]
  %s8 = sld [smem:[#allocation0]]
  $region61: #{tpu_custom_call.1} parent=0
    _
  %s10 = ssub.s32 1, %s8
  %s11 = scalar_select 0, %s10, %s8
  $region1: #{tpu_custom_call.1} parent=0
    #allocation2 [shape = 'u8[32768]{0}', space=vmem, size = 0x8000, scoped, tag = 'output window, operand 0']
    #allocation3 [shape = 's32[2]{0}', space=sflag, size = 0x8, scoped, tag = 'scoped memory for tpu_custom_call.1']
    %12 = vsyncpa [#allocation3], 0
    %s13 = scalar_lea.sflag [#allocation3], 1
    %14 = vsyncpa %s13, 0
    loop: start=0, step=1, limit=4
    $region2: #{tpu_custom_call.1} parent=1 // loop_pre_header
      _
    $region3: #{tpu_custom_call.1} parent=1 // loop_header
      %s16 = sphi 0, %s20
      %p17 = scmp.ge.s32.totalorder %s16, 4
      %s26 = sphi 0, %s28
      %s29 = sphi 0, %s26
      %s30 = sphi 0, %s29
      %s46 = sphi 0, %s30
      %s50 = sphi 0, %s50
      %s52 = sphi 0, %s50
      %s53 = sphi 0, %s52
      %s67 = sphi 0, %s53
      %s71 = sphi 0, %s71
      %s73 = sphi 0, %s71
      %s74 = sphi 0, %s73
      %s88 = sphi 0, %s74
      %s92 = sphi 0, %s92
      %s94 = sphi 0, %s92
      %s95 = sphi 0, %s94
      %s109 = sphi 0, %s95
      %s113 = sphi 0, %s113
      %s115 = sphi 0, %s113
      %s116 = sphi 0, %s115
      %s130 = sphi 0, %s116
      %s134 = sphi 0, %s134
      %s136 = sphi 0, %s134
      %s137 = sphi 0, %s136
      %s151 = sphi 0, %s137
      %s155 = sphi 0, %s155
      %s157 = sphi 0, %s155
      %s158 = sphi 0, %s157
      %s172 = sphi 0, %s158
      %s178 = sphi 0, %s180
      %s181 = sphi 0, %s178
      %s182 = sphi 0, %s181
      %s198 = sphi 0, %s182
    $region4: #{tpu_custom_call.1} parent=1 // loop_header_branch
      %19 = sbr.rel (%p17) target = $region8
    $region5: #{tpu_custom_call.1} parent=1 // loop_body
      %s21 = ssub.s32 %s16, 1
      %s22 = ssub.s32 %s16, 2
      %s23 = sadd.s32 %s16, 1
      %s24 = ssub.s32 %s16, %s23
      %p25 = scmp.eq.s32.totalorder %s24, 0
      %s27 = sadd.s32 %s26, 1
      %s28 = scalar_select %p25, %s26, %s27
      %p31 = pneg %p25
      %p32 = scmp.eq.s32.totalorder %s16, 1
      %p33 = por %p31, %p32
      %p34 = scmp.ne.s32.totalorder %s26, %s29
      %p35 = scmp.eq.s32.totalorder %s16, 0
      %p36 = por %p34, %p35
      %p37 = scmp.ne.s32.totalorder %s26, %s29
      %p38 = scmp.eq.s32.totalorder %s21, 1
      %p39 = por %p37, %p38
      %p40 = scmp.ne.s32.totalorder %s29, %s30
      %p41 = scmp.eq.s32.totalorder %s21, 0
      %p42 = por %p40, %p41
      %p43 = scmp.ne.s32.totalorder %s29, %s30
      %p44 = scmp.eq.s32.totalorder %s22, 1
      %p45 = por %p43, %p44
      %p47 = scmp.ne.s32.totalorder %s30, %s46
      %p48 = scmp.eq.s32.totalorder %s22, 0
      %p49 = por %p47, %p48
      %s51 = sadd.s32 %s50, 1
      %p54 = scmp.eq.s32.totalorder %s16, 1
      %p55 = scmp.ne.s32.totalorder %s50, %s52
      %p56 = scmp.eq.s32.totalorder %s16, 0
      %p57 = por %p55, %p56
      %p58 = scmp.ne.s32.totalorder %s50, %s52
      %p59 = scmp.eq.s32.totalorder %s21, 1
      %p60 = por %p58, %p59
      %p61 = scmp.ne.s32.totalorder %s52, %s53
      %p62 = scmp.eq.s32.totalorder %s21, 0
      %p63 = por %p61, %p62
      %p64 = scmp.ne.s32.totalorder %s52, %s53
      %p65 = scmp.eq.s32.totalorder %s22, 1
      %p66 = por %p64, %p65
      %p68 = scmp.ne.s32.totalorder %s53, %s67
      %p69 = scmp.eq.s32.totalorder %s22, 0
      %p70 = por %p68, %p69
      %s72 = sadd.s32 %s71, 1
      %p75 = scmp.eq.s32.totalorder %s16, 1
      %p76 = scmp.ne.s32.totalorder %s71, %s73
      %p77 = scmp.eq.s32.totalorder %s16, 0
      %p78 = por %p76, %p77
      %p79 = scmp.ne.s32.totalorder %s71, %s73
      %p80 = scmp.eq.s32.totalorder %s21, 1
      %p81 = por %p79, %p80
      %p82 = scmp.ne.s32.totalorder %s73, %s74
      %p83 = scmp.eq.s32.totalorder %s21, 0
      %p84 = por %p82, %p83
      %p85 = scmp.ne.s32.totalorder %s73, %s74
      %p86 = scmp.eq.s32.totalorder %s22, 1
      %p87 = por %p85, %p86
      %p89 = scmp.ne.s32.totalorder %s74, %s88
      %p90 = scmp.eq.s32.totalorder %s22, 0
      %p91 = por %p89, %p90
      %s93 = sadd.s32 %s92, 1
      %p96 = scmp.eq.s32.totalorder %s16, 1
      %p97 = scmp.ne.s32.totalorder %s92, %s94
      %p98 = scmp.eq.s32.totalorder %s16, 0
      %p99 = por %p97, %p98
      %p100 = scmp.ne.s32.totalorder %s92, %s94
      %p101 = scmp.eq.s32.totalorder %s21, 1
      %p102 = por %p100, %p101
      %p103 = scmp.ne.s32.totalorder %s94, %s95
      %p104 = scmp.eq.s32.totalorder %s21, 0
      %p105 = por %p103, %p104
      %p106 = scmp.ne.s32.totalorder %s94, %s95
      %p107 = scmp.eq.s32.totalorder %s22, 1
      %p108 = por %p106, %p107
      %p110 = scmp.ne.s32.totalorder %s95, %s109
      %p111 = scmp.eq.s32.totalorder %s22, 0
      %p112 = por %p110, %p111
      %s114 = sadd.s32 %s113, 1
      %p117 = scmp.eq.s32.totalorder %s16, 1
      %p118 = scmp.ne.s32.totalorder %s113, %s115
      %p119 = scmp.eq.s32.totalorder %s16, 0
      %p120 = por %p118, %p119
      %p121 = scmp.ne.s32.totalorder %s113, %s115
      %p122 = scmp.eq.s32.totalorder %s21, 1
      %p123 = por %p121, %p122
      %p124 = scmp.ne.s32.totalorder %s115, %s116
      %p125 = scmp.eq.s32.totalorder %s21, 0
      %p126 = por %p124, %p125
      %p127 = scmp.ne.s32.totalorder %s115, %s116
      %p128 = scmp.eq.s32.totalorder %s22, 1
      %p129 = por %p127, %p128
      %p131 = scmp.ne.s32.totalorder %s116, %s130
      %p132 = scmp.eq.s32.totalorder %s22, 0
      %p133 = por %p131, %p132
      %s135 = sadd.s32 %s134, 1
      %p138 = scmp.eq.s32.totalorder %s16, 1
      %p139 = scmp.ne.s32.totalorder %s134, %s136
      %p140 = scmp.eq.s32.totalorder %s16, 0
      %p141 = por %p139, %p140
      %p142 = scmp.ne.s32.totalorder %s134, %s136
      %p143 = scmp.eq.s32.totalorder %s21, 1
      %p144 = por %p142, %p143
      %p145 = scmp.ne.s32.totalorder %s136, %s137
      %p146 = scmp.eq.s32.totalorder %s21, 0
      %p147 = por %p145, %p146
      %p148 = scmp.ne.s32.totalorder %s136, %s137
      %p149 = scmp.eq.s32.totalorder %s22, 1
      %p150 = por %p148, %p149
      %p152 = scmp.ne.s32.totalorder %s137, %s151
      %p153 = scmp.eq.s32.totalorder %s22, 0
      %p154 = por %p152, %p153
      %s156 = sadd.s32 %s155, 1
      %p159 = scmp.eq.s32.totalorder %s16, 1
      %p160 = scmp.ne.s32.totalorder %s155, %s157
      %p161 = scmp.eq.s32.totalorder %s16, 0
      %p162 = por %p160, %p161
      %p163 = scmp.ne.s32.totalorder %s155, %s157
      %p164 = scmp.eq.s32.totalorder %s21, 1
      %p165 = por %p163, %p164
      %p166 = scmp.ne.s32.totalorder %s157, %s158
      %p167 = scmp.eq.s32.totalorder %s21, 0
      %p168 = por %p166, %p167
      %p169 = scmp.ne.s32.totalorder %s157, %s158
      %p170 = scmp.eq.s32.totalorder %s22, 1
      %p171 = por %p169, %p170
      %p173 = scmp.ne.s32.totalorder %s158, %s172
      %p174 = scmp.eq.s32.totalorder %s22, 0
      %p175 = por %p173, %p174
      %s176 = ssub.s32 %s16, %s23
      %p177 = scmp.eq.s32.totalorder %s176, 0
      %s179 = sadd.s32 %s178, 1
      %s180 = scalar_select %p177, %s178, %s179
      %p183 = pneg %p177
      %p184 = scmp.eq.s32.totalorder %s16, 1
      %p185 = por %p183, %p184
      %p186 = scmp.ne.s32.totalorder %s178, %s181
      %p187 = scmp.eq.s32.totalorder %s16, 0
      %p188 = por %p186, %p187
      %p189 = scmp.ne.s32.totalorder %s178, %s181
      %p190 = scmp.eq.s32.totalorder %s21, 1
      %p191 = por %p189, %p190
      %p192 = scmp.ne.s32.totalorder %s181, %s182
      %p193 = scmp.eq.s32.totalorder %s21, 0
      %p194 = por %p192, %p193
      %p195 = scmp.ne.s32.totalorder %s181, %s182
      %p196 = scmp.eq.s32.totalorder %s22, 1
      %p197 = por %p195, %p196
      %p199 = scmp.ne.s32.totalorder %s182, %s198
      %p200 = scmp.eq.s32.totalorder %s22, 0
      %p201 = por %p199, %p200
      %p202 = scmp.le.s32.totalorder 1, %s16
      %p203 = scmp.lt.s32.totalorder %s16, 3
      %p204 = pnand %p202, %p203
      %p205 = pneg %p204
      // Predicated region
      $region9: #{tpu_custom_call.1} parent=5 // pred_check
        _
      $region10: #{tpu_custom_call.1} parent=5 // pred_check_branch
        %207 = sbr.rel (%p204) target = $region12
      $region11: #{tpu_custom_call.1} parent=5 // pred_region
        %s208 = ssub.s32 %s16, 1
        // Predicated region
        $region13: #{tpu_custom_call.1} parent=11 // pred_check
          %p209 = pneg %p63
        $region14: #{tpu_custom_call.1} parent=11 // pred_check_branch
          %211 = sbr.rel (%p209) target = $region16
        $region15: #{tpu_custom_call.1} parent=11 // pred_region
          _
        $region16: #{tpu_custom_call.1} parent=11 // pred_fallthru
          _
        // Predicated region
        $region17: #{tpu_custom_call.1} parent=11 // pred_check
          %p212 = pneg %p84
        $region18: #{tpu_custom_call.1} parent=11 // pred_check_branch
          %214 = sbr.rel (%p212) target = $region20
        $region19: #{tpu_custom_call.1} parent=11 // pred_region
          _
        $region20: #{tpu_custom_call.1} parent=11 // pred_fallthru
          _
        // Predicated region
        $region21: #{tpu_custom_call.1} parent=11 // pred_check
          %p215 = pneg %p105
        $region22: #{tpu_custom_call.1} parent=11 // pred_check_branch
          %217 = sbr.rel (%p215) target = $region24
        $region23: #{tpu_custom_call.1} parent=11 // pred_region
          _
        $region24: #{tpu_custom_call.1} parent=11 // pred_fallthru
          _
        // Predicated region
        $region25: #{tpu_custom_call.1} parent=11 // pred_check
          %p218 = pneg %p126
        $region26: #{tpu_custom_call.1} parent=11 // pred_check_branch
          %220 = sbr.rel (%p218) target = $region28
        $region27: #{tpu_custom_call.1} parent=11 // pred_region
          _
        $region28: #{tpu_custom_call.1} parent=11 // pred_fallthru
          _
        // Predicated region
        $region29: #{tpu_custom_call.1} parent=11 // pred_check
          %p221 = pneg %p147
        $region30: #{tpu_custom_call.1} parent=11 // pred_check_branch
          %223 = sbr.rel (%p221) target = $region32
        $region31: #{tpu_custom_call.1} parent=11 // pred_region
          _
        $region32: #{tpu_custom_call.1} parent=11 // pred_fallthru
          _
        // Predicated region
        $region33: #{tpu_custom_call.1} parent=11 // pred_check
          %p224 = pneg %p168
        $region34: #{tpu_custom_call.1} parent=11 // pred_check_branch
          %226 = sbr.rel (%p224) target = $region36
        $region35: #{tpu_custom_call.1} parent=11 // pred_region
          _
        $region36: #{tpu_custom_call.1} parent=11 // pred_fallthru
          _
      $region12: #{tpu_custom_call.1} parent=5 // pred_fallthru
        _
      %p227 = scmp.lt.s32.totalorder %s16, 2
      // Predicated region
      $region37: #{tpu_custom_call.1} parent=5 // pred_check
        %p228 = pneg %p227
      $region38: #{tpu_custom_call.1} parent=5 // pred_check_branch
        %230 = sbr.rel (%p228) target = $region40
      $region39: #{tpu_custom_call.1} parent=5 // pred_region
        // Predicated region
        $region41: #{tpu_custom_call.1} parent=39 // pred_check
          %p231 = pneg %p36
        $region42: #{tpu_custom_call.1} parent=39 // pred_check_branch
          %233 = sbr.rel (%p231) target = $region44
        $region43: #{tpu_custom_call.1} parent=39 // pred_region
          %s234 = smul.u32 8, %s16
          %p235 = scmp.lt.s32.totalorder %s234, 15
          %s236 = scalar_select %p235, %s234, 15
          %s237 = smul.addr %s236, 2
          %s238 = smul.addr %s237, 8
          %s239 = scalar_lea.vmem %s0, %s238
          %s240 = smul.u32 8, %s16
        $region44: #{tpu_custom_call.1} parent=39 // pred_fallthru
          _
      $region40: #{tpu_custom_call.1} parent=5 // pred_fallthru
        _
      %p241 = scmp.le.s32.totalorder 1, %s16
      %p242 = scmp.lt.s32.totalorder %s16, 3
      %p243 = pnand %p241, %p242
      %p244 = pneg %p243
      // Predicated region
      $region45: #{tpu_custom_call.1} parent=5 // pred_check
        _
      $region46: #{tpu_custom_call.1} parent=5 // pred_check_branch
        %246 = sbr.rel (%p243) target = $region48
      $region47: #{tpu_custom_call.1} parent=5 // pred_region
        %s247 = ssub.s32 %s16, 1
        %s248 = smul.u32 8, %s21
        %p249 = scmp.lt.s32.totalorder %s248, 15
        %s250 = scalar_select %p249, %s248, 15
        %s251 = smul.addr %s250, 2
        %s252 = smul.addr %s251, 8
        %s253 = scalar_lea.vmem %s0, %s252
        %p254 = pneg %p42
        %p255 = pneg %p39
        %p256 = pneg %p63
        %p257 = pneg %p60
        %p258 = pneg %p84
        %p259 = pneg %p81
        %p260 = pneg %p105
        %p261 = pneg %p102
        %p262 = pneg %p126
        %p263 = pneg %p123
        %p264 = pneg %p147
        %p265 = pneg %p144
        %p266 = pneg %p168
        %p267 = pneg %p165
        %p268 = pneg %p194
        %p269 = pneg %p191
        %s270 = sand.u32 %s181, 1
        %s271 = scalar_lea.sflag [#allocation3], %s270
        %s272 = sand.u32 %s181, 1
        %s273 = smul.addr %s272, 32
        %s274 = scalar_lea.vmem [#allocation2], %s273
        %s275 = smul.u32 8, %s21
        %p276 = scmp.lt.s32.totalorder %s275, 15
        %s277 = scalar_select %p276, %s275, 15
        %s278 = smul.addr %s277, 2
        %s279 = smul.addr %s278, 8
        %s280 = scalar_lea.vmem %s0, %s279
        %s281 = smul.u32 8, %s21
        %s282 = smul.u32 8, %s21
        %v284 = vld [vmem:[%s280] sm:$0xff]
        %v285 = vld [vmem:[%s280 + $0x8] sm:$0xff]
        %v286 = vld [vmem:[%s280 + $0x10] sm:$0xff]
        %v287 = vld [vmem:[%s280 + $0x18] sm:$0xff]
        %v288 = vld [vmem:[%s280 + $0x20] sm:$0xff]
        %v289 = vld [vmem:[%s280 + $0x28] sm:$0xff]
        %v290 = vld [vmem:[%s280 + $0x30] sm:$0xff]
        %v291 = vld [vmem:[%s280 + $0x38] sm:$0xff]
        %v292 = vld [vmem:[%s280 + $0x40] sm:$0xff]
        %v293 = vld [vmem:[%s280 + $0x48] sm:$0xff]
        %v294 = vld [vmem:[%s280 + $0x50] sm:$0xff]
        %v295 = vld [vmem:[%s280 + $0x58] sm:$0xff]
        %v296 = vld [vmem:[%s280 + $0x60] sm:$0xff]
        %v297 = vld [vmem:[%s280 + $0x68] sm:$0xff]
        %v298 = vld [vmem:[%s280 + $0x70] sm:$0xff]
        %v299 = vld [vmem:[%s280 + $0x78] sm:$0xff]
        %v300 = vpack.c.bf16 %v286, %v284
        %v301 = vpack.c.bf16 %v287, %v285
        %v302 = vpack.c.bf16 %v290, %v288
        %v303 = vpack.c.bf16 %v291, %v289
        %v304 = vpack.c.bf16 %v294, %v292
        %v305 = vpack.c.bf16 %v295, %v293
        %v306 = vpack.c.bf16 %v298, %v296
        %v307 = vpack.c.bf16 %v299, %v297
        %v308 = vld [vmem:[%s1] sm:$0xff]
        %v309 = vld [vmem:[%s1 + $0x8] sm:$0xff]
        %v310 = vld [vmem:[%s1 + $0x10] sm:$0xff]
        %v311 = vld [vmem:[%s1 + $0x18] sm:$0xff]
        %v312 = vld [vmem:[%s1 + $0x20] sm:$0xff]
        %v313 = vld [vmem:[%s1 + $0x28] sm:$0xff]
        %v314 = vld [vmem:[%s1 + $0x30] sm:$0xff]
        %v315 = vld [vmem:[%s1 + $0x38] sm:$0xff]
        %v316 = vld [vmem:[%s1 + $0x40] sm:$0xff]
        %v317 = vld [vmem:[%s1 + $0x48] sm:$0xff]
        %v318 = vld [vmem:[%s1 + $0x50] sm:$0xff]
        %v319 = vld [vmem:[%s1 + $0x58] sm:$0xff]
        %v320 = vld [vmem:[%s1 + $0x60] sm:$0xff]
        %v321 = vld [vmem:[%s1 + $0x68] sm:$0xff]
        %v322 = vld [vmem:[%s1 + $0x70] sm:$0xff]
        %v323 = vld [vmem:[%s1 + $0x78] sm:$0xff]
        %v324 = vld [vmem:[%s1 + $0x80] sm:$0xff]
        %v325 = vld [vmem:[%s1 + $0x88] sm:$0xff]
        %v326 = vld [vmem:[%s1 + $0x90] sm:$0xff]
        %v327 = vld [vmem:[%s1 + $0x98] sm:$0xff]
        %v328 = vld [vmem:[%s1 + $0xa0] sm:$0xff]
        %v329 = vld [vmem:[%s1 + $0xa8] sm:$0xff]
        %v330 = vld [vmem:[%s1 + $0xb0] sm:$0xff]
        %v331 = vld [vmem:[%s1 + $0xb8] sm:$0xff]
        %v332 = vld [vmem:[%s1 + $0xc0] sm:$0xff]
        %v333 = vld [vmem:[%s2] sm:$0x3]
        %v335 = vperm.slane %v333, 0
        %v336 = vperm.slane %v333, 1
        %v364 = vunpack.c.l.b16 %v308
        %v365 = vunpack.c.h.b16 %v308
        %v366 = vunpack.c.l.b16 %v309
        %v367 = vunpack.c.h.b16 %v309
        %v368 = vunpack.c.l.b16 %v310
        %v369 = vunpack.c.h.b16 %v310
        %v370 = vunpack.c.l.b16 %v311
        %v371 = vunpack.c.h.b16 %v311
        %v372 = vunpack.c.l.b16 %v312
        %v373 = vunpack.c.h.b16 %v312
        %v374 = vunpack.c.l.b16 %v313
        %v375 = vunpack.c.h.b16 %v313
        %v376 = vunpack.c.l.b16 %v314
        %v377 = vunpack.c.h.b16 %v314
        %v378 = vunpack.c.l.b16 %v315
        %v379 = vunpack.c.h.b16 %v315
        %v380 = vunpack.c.l.b16 %v316
        %v381 = vunpack.c.h.b16 %v316
        %v382 = vunpack.c.l.b16 %v317
        %v383 = vunpack.c.h.b16 %v317
        %v384 = vunpack.c.l.b16 %v318
        %v385 = vunpack.c.h.b16 %v318
        %v386 = vunpack.c.l.b16 %v319
        %v387 = vunpack.c.h.b16 %v319
        %v388 = vunpack.c.l.b16 %v320
        %v389 = vunpack.c.h.b16 %v320
        %v390 = vunpack.c.l.b16 %v321
        %v391 = vunpack.c.h.b16 %v321
        %v392 = vunpack.c.l.b16 %v322
        %v393 = vunpack.c.h.b16 %v322
        %v394 = vunpack.c.l.b16 %v323
        %v395 = vunpack.c.h.b16 %v323
        %v396 = vunpack.c.l.b16 %v324
        %v397 = vunpack.c.h.b16 %v324
        %v398 = vunpack.c.l.b16 %v325
        %v399 = vunpack.c.h.b16 %v325
        %v400 = vunpack.c.l.b16 %v326
        %v401 = vunpack.c.h.b16 %v326
        %v402 = vunpack.c.l.b16 %v327
        %v403 = vunpack.c.h.b16 %v327
        %v404 = vunpack.c.l.b16 %v328
        %v405 = vunpack.c.h.b16 %v328
        %v406 = vunpack.c.l.b16 %v329
        %v407 = vunpack.c.h.b16 %v329
        %v408 = vunpack.c.l.b16 %v330
        %v409 = vunpack.c.h.b16 %v330
        %v410 = vunpack.c.l.b16 %v331
        %v411 = vunpack.c.h.b16 %v331
        %v412 = vunpack.c.l.b16 %v332
        %v413 = vunpack.c.h.b16 %v332
        %v414 = vpack.c.b16 %v366, %v364
        %v415 = vpack.c.b16 %v367, %v365
        %v416 = vpack.c.b16 %v370, %v368
        %v417 = vpack.c.b16 %v371, %v369
        %v418 = vpack.c.b16 %v374, %v372
        %v419 = vpack.c.b16 %v375, %v373
        %v420 = vpack.c.b16 %v378, %v376
        %v421 = vpack.c.b16 %v379, %v377
        %v422 = vpack.c.b16 %v382, %v380
        %v423 = vpack.c.b16 %v383, %v381
        %v424 = vpack.c.b16 %v386, %v384
        %v425 = vpack.c.b16 %v387, %v385
        %v426 = vpack.c.b16 %v390, %v388
        %v427 = vpack.c.b16 %v391, %v389
        %v428 = vpack.c.b16 %v394, %v392
        %v429 = vpack.c.b16 %v395, %v393
        %v430 = vpack.c.b16 %v398, %v396
        %v431 = vpack.c.b16 %v399, %v397
        %v432 = vpack.c.b16 %v402, %v400
        %v433 = vpack.c.b16 %v403, %v401
        %v434 = vpack.c.b16 %v406, %v404
        %v435 = vpack.c.b16 %v407, %v405
        %v436 = vpack.c.b16 %v410, %v408
        %v437 = vpack.c.b16 %v411, %v409
        %v438 = vpack.c.b16 %v412, %v412
        %v439 = vpack.c.b16 %v413, %v413
        %vm464 = vcmask 588800
        %v466 = vsel %vm464, %v301, 0
        %v469 = vsel %vm464, %v303, 0
        %v472 = vsel %vm464, %v305, 0
        %v475 = vsel %vm464, %v307, 0
        %vm477 = vcmask 1043456
        %v479 = vsel %vm477, %v438, 0
        %v482 = vsel %vm477, %v439, 0
        %484 = vmatpush.bf16.msra.mxu0 %v428
        %485 = vmatpush.bf16.msra.mxu0 %v426
        %486 = vmatpush.bf16.msra.mxu0 %v424
        %487 = vmatpush.bf16.msra.mxu0 %v422
        %488 = vmatpush.bf16.msra.mxu0 %v420
        %489 = vmatpush.bf16.msra.mxu0 %v418
        %490 = vmatpush.bf16.msra.mxu0 %v416
        %491 = vmatpush.bf16.msra.mxu0 %v414
        %492 = vmatmul.bf16.gmra.mxu0 %v300
        %v493 = vpop.f32.mrf.mxu0
        %v494 = vadd.f32 %v335, %v493
        %v495 = vpop.f32.mrf.mxu0
        %v496 = vadd.f32 %v335, %v495
        %497 = vmatmul.bf16.gmra.mxu0 %v302
        %v498 = vpop.f32.mrf.mxu0
        %v499 = vadd.f32 %v335, %v498
        %v500 = vpop.f32.mrf.mxu0
        %v501 = vadd.f32 %v335, %v500
        %502 = vmatmul.bf16.gmra.mxu0 %v304
        %v503 = vpop.f32.mrf.mxu0
        %v504 = vadd.f32 %v335, %v503
        %v505 = vpop.f32.mrf.mxu0
        %v506 = vadd.f32 %v335, %v505
        %507 = vmatmul.bf16.gmra.mxu0 %v306
        %v508 = vpop.f32.mrf.mxu0
        %v509 = vadd.f32 %v335, %v508
        %v510 = vpop.f32.mrf.mxu0
        %v511 = vadd.f32 %v335, %v510
        %512 = vdwg.mxu0
        %513 = vmatpush.bf16.msra.mxu0 0
        %514 = vmatpush.bf16.msra.mxu0 0
        %515 = vmatpush.bf16.msra.mxu0 0
        %516 = vmatpush.bf16.msra.mxu0 %v479
        %517 = vmatpush.bf16.msra.mxu0 %v436
        %518 = vmatpush.bf16.msra.mxu0 %v434
        %519 = vmatpush.bf16.msra.mxu0 %v432
        %520 = vmatpush.bf16.msra.mxu0 %v430
        %521 = vmatmul.bf16.gmra.mxu0 %v466
        %v522 = vpop.f32.mrf.mxu0
        %v523 = vadd.f32 %v494, %v522
        %v524 = vpop.f32.mrf.mxu0
        %v525 = vadd.f32 %v496, %v524
        %526 = vmatmul.bf16.gmra.mxu0 %v469
        %v527 = vpop.f32.mrf.mxu0
        %v528 = vadd.f32 %v499, %v527
        %v529 = vpop.f32.mrf.mxu0
        %v530 = vadd.f32 %v501, %v529
        %531 = vmatmul.bf16.gmra.mxu0 %v472
        %v532 = vpop.f32.mrf.mxu0
        %v533 = vadd.f32 %v504, %v532
        %v534 = vpop.f32.mrf.mxu0
        %v535 = vadd.f32 %v506, %v534
        %536 = vmatmul.bf16.gmra.mxu0 %v475
        %v537 = vpop.f32.mrf.mxu0
        %v538 = vadd.f32 %v509, %v537
        %v539 = vpop.f32.mrf.mxu0
        %v540 = vadd.f32 %v511, %v539
        %541 = vdwg.mxu0
        %542 = vmatpush.bf16.msra.mxu0 %v429
        %543 = vmatpush.bf16.msra.mxu0 %v427
        %544 = vmatpush.bf16.msra.mxu0 %v425
        %545 = vmatpush.bf16.msra.mxu0 %v423
        %546 = vmatpush.bf16.msra.mxu0 %v421
        %547 = vmatpush.bf16.msra.mxu0 %v419
        %548 = vmatpush.bf16.msra.mxu0 %v417
        %549 = vmatpush.bf16.msra.mxu0 %v415
        %550 = vmatmul.bf16.gmra.mxu0 %v300
        %v551 = vpop.f32.mrf.mxu0
        %v552 = vadd.f32 %v336, %v551
        %v553 = vpop.f32.mrf.mxu0
        %v554 = vadd.f32 %v336, %v553
        %555 = vmatmul.bf16.gmra.mxu0 %v302
        %v556 = vpop.f32.mrf.mxu0
        %v557 = vadd.f32 %v336, %v556
        %v558 = vpop.f32.mrf.mxu0
        %v559 = vadd.f32 %v336, %v558
        %560 = vmatmul.bf16.gmra.mxu0 %v304
        %v561 = vpop.f32.mrf.mxu0
        %v562 = vadd.f32 %v336, %v561
        %v563 = vpop.f32.mrf.mxu0
        %v564 = vadd.f32 %v336, %v563
        %565 = vmatmul.bf16.gmra.mxu0 %v306
        %v566 = vpop.f32.mrf.mxu0
        %v567 = vadd.f32 %v336, %v566
        %v568 = vpop.f32.mrf.mxu0
        %v569 = vadd.f32 %v336, %v568
        %570 = vdwg.mxu0
        %571 = vmatpush.bf16.msra.mxu0 0
        %572 = vmatpush.bf16.msra.mxu0 0
        %573 = vmatpush.bf16.msra.mxu0 0
        %574 = vmatpush.bf16.msra.mxu0 %v482
        %575 = vmatpush.bf16.msra.mxu0 %v437
        %576 = vmatpush.bf16.msra.mxu0 %v435
        %577 = vmatpush.bf16.msra.mxu0 %v433
        %578 = vmatpush.bf16.msra.mxu0 %v431
        %579 = vmatmul.bf16.gmra.mxu0 %v466
        %v580 = vpop.f32.mrf.mxu0
        %v581 = vadd.f32 %v552, %v580
        %v582 = vpop.f32.mrf.mxu0
        %v583 = vadd.f32 %v554, %v582
        %584 = vmatmul.bf16.gmra.mxu0 %v469
        %v585 = vpop.f32.mrf.mxu0
        %v586 = vadd.f32 %v557, %v585
        %v587 = vpop.f32.mrf.mxu0
        %v588 = vadd.f32 %v559, %v587
        %589 = vmatmul.bf16.gmra.mxu0 %v472
        %v590 = vpop.f32.mrf.mxu0
        %v591 = vadd.f32 %v562, %v590
        %v592 = vpop.f32.mrf.mxu0
        %v593 = vadd.f32 %v564, %v592
        %594 = vmatmul.bf16.gmra.mxu0 %v475
        %v595 = vpop.f32.mrf.mxu0
        %v596 = vadd.f32 %v567, %v595
        %v597 = vpop.f32.mrf.mxu0
        %v598 = vadd.f32 %v569, %v597
        %599 = vdwg.mxu0
        %v600 = vmax.f32 %v523, 0.0
        %v601 = vmax.f32 %v581, 0.0
        %v602 = vmax.f32 %v525, 0.0
        %v603 = vmax.f32 %v583, 0.0
        %v604 = vmax.f32 %v528, 0.0
        %v605 = vmax.f32 %v586, 0.0
        %v606 = vmax.f32 %v530, 0.0
        %v607 = vmax.f32 %v588, 0.0
        %v608 = vmax.f32 %v533, 0.0
        %v609 = vmax.f32 %v591, 0.0
        %v610 = vmax.f32 %v535, 0.0
        %v611 = vmax.f32 %v593, 0.0
        %v612 = vmax.f32 %v538, 0.0
        %v613 = vmax.f32 %v596, 0.0
        %v614 = vmax.f32 %v540, 0.0
        %v615 = vmax.f32 %v598, 0.0
        %v616 = vpack.c.bf16 %v602, %v600
        %v617 = vpack.c.bf16 %v603, %v601
        %v618 = vpack.c.bf16 %v606, %v604
        %v619 = vpack.c.bf16 %v607, %v605
        %v620 = vpack.c.bf16 %v610, %v608
        %v621 = vpack.c.bf16 %v611, %v609
        %v622 = vpack.c.bf16 %v614, %v612
        %v623 = vpack.c.bf16 %v615, %v613
        %v624 = vld [vmem:[%s3] sm:$0xf]
        %v625 = vld [vmem:[%s3 + $0x4] sm:$0xf]
        %v626 = vld [vmem:[%s3 + $0x8] sm:$0xf]
        %v627 = vld [vmem:[%s3 + $0xc] sm:$0xf]
        %v628 = vld [vmem:[%s3 + $0x10] sm:$0xf]
        %v629 = vld [vmem:[%s3 + $0x14] sm:$0xf]
        %v630 = vld [vmem:[%s3 + $0x18] sm:$0xf]
        %v631 = vld [vmem:[%s3 + $0x1c] sm:$0xf]
        %v632 = vld [vmem:[%s3 + $0x20] sm:$0xf]
        %v633 = vld [vmem:[%s3 + $0x24] sm:$0xf]
        %v634 = vld [vmem:[%s3 + $0x28] sm:$0xf]
        %v635 = vld [vmem:[%s3 + $0x2c] sm:$0xf]
        %v636 = vld [vmem:[%s3 + $0x30] sm:$0xf]
        %v637 = vld [vmem:[%s3 + $0x34] sm:$0xf]
        %v638 = vld [vmem:[%s3 + $0x38] sm:$0xf]
        %v639 = vld [vmem:[%s3 + $0x3c] sm:$0xf]
        %v640 = vld [vmem:[%s3 + $0x40] sm:$0xf]
        %v641 = vld [vmem:[%s3 + $0x44] sm:$0xf]
        %v642 = vld [vmem:[%s3 + $0x48] sm:$0xf]
        %v643 = vld [vmem:[%s3 + $0x4c] sm:$0xf]
        %v644 = vld [vmem:[%s3 + $0x50] sm:$0xf]
        %v645 = vld [vmem:[%s3 + $0x54] sm:$0xf]
        %v646 = vld [vmem:[%s3 + $0x58] sm:$0xf]
        %v647 = vld [vmem:[%s3 + $0x5c] sm:$0xf]
        %v648 = vld [vmem:[%s3 + $0x60] sm:$0xf]
        %v649 = vld [vmem:[%s3 + $0x64] sm:$0xf]
        %v650 = vld [vmem:[%s3 + $0x68] sm:$0xf]
        %v651 = vld [vmem:[%s3 + $0x6c] sm:$0xf]
        %v652 = vld [vmem:[%s3 + $0x70] sm:$0xf]
        %v653 = vld [vmem:[%s3 + $0x74] sm:$0xf]
        %v654 = vld [vmem:[%s3 + $0x78] sm:$0xf]
        %v655 = vld [vmem:[%s3 + $0x7c] sm:$0xf]
        %v656 = vld [vmem:[%s4] sm:$0x1]
        %v658 = vperm.slane %v656, 0
        %v692 = vunpack.c.l.b16 %v624
        %v693 = vunpack.c.l.b16 %v625
        %v694 = vunpack.c.l.b16 %v626
        %v695 = vunpack.c.l.b16 %v627
        %v696 = vunpack.c.l.b16 %v628
        %v697 = vunpack.c.l.b16 %v629
        %v698 = vunpack.c.l.b16 %v630
        %v699 = vunpack.c.l.b16 %v631
        %v700 = vunpack.c.l.b16 %v632
        %v701 = vunpack.c.l.b16 %v633
        %v702 = vunpack.c.l.b16 %v634
        %v703 = vunpack.c.l.b16 %v635
        %v704 = vunpack.c.l.b16 %v636
        %v705 = vunpack.c.l.b16 %v637
        %v706 = vunpack.c.l.b16 %v638
        %v707 = vunpack.c.l.b16 %v639
        %v708 = vunpack.c.l.b16 %v640
        %v709 = vunpack.c.l.b16 %v641
        %v710 = vunpack.c.l.b16 %v642
        %v711 = vunpack.c.l.b16 %v643
        %v712 = vunpack.c.l.b16 %v644
        %v713 = vunpack.c.l.b16 %v645
        %v714 = vunpack.c.l.b16 %v646
        %v715 = vunpack.c.l.b16 %v647
        %v716 = vunpack.c.l.b16 %v648
        %v717 = vunpack.c.l.b16 %v649
        %v718 = vunpack.c.l.b16 %v650
        %v719 = vunpack.c.l.b16 %v651
        %v720 = vunpack.c.l.b16 %v652
        %v721 = vunpack.c.l.b16 %v653
        %v722 = vunpack.c.l.b16 %v654
        %v723 = vunpack.c.l.b16 %v655
        %v724 = vpack.c.b16 %v693, %v692
        %v725 = vpack.c.b16 %v695, %v694
        %v726 = vpack.c.b16 %v697, %v696
        %v727 = vpack.c.b16 %v699, %v698
        %v728 = vpack.c.b16 %v701, %v700
        %v729 = vpack.c.b16 %v703, %v702
        %v730 = vpack.c.b16 %v705, %v704
        %v731 = vpack.c.b16 %v707, %v706
        %v732 = vpack.c.b16 %v709, %v708
        %v733 = vpack.c.b16 %v711, %v710
        %v734 = vpack.c.b16 %v713, %v712
        %v735 = vpack.c.b16 %v715, %v714
        %v736 = vpack.c.b16 %v717, %v716
        %v737 = vpack.c.b16 %v719, %v718
        %v738 = vpack.c.b16 %v721, %v720
        %v739 = vpack.c.b16 %v723, %v722
        %756 = vmatpush.bf16.msra.mxu0 %v731
        %757 = vmatpush.bf16.msra.mxu0 %v730
        %758 = vmatpush.bf16.msra.mxu0 %v729
        %759 = vmatpush.bf16.msra.mxu0 %v728
        %760 = vmatpush.bf16.msra.mxu0 %v727
        %761 = vmatpush.bf16.msra.mxu0 %v726
        %762 = vmatpush.bf16.msra.mxu0 %v725
        %763 = vmatpush.bf16.msra.mxu0 %v724
        %764 = vmatmul.bf16.gmra.mxu0 %v616
        %v765 = vpop.f32.mrf.mxu0
        %v766 = vadd.f32 %v658, %v765
        %v767 = vpop.f32.mrf.mxu0
        %v768 = vadd.f32 %v658, %v767
        %769 = vmatmul.bf16.gmra.mxu0 %v618
        %v770 = vpop.f32.mrf.mxu0
        %v771 = vadd.f32 %v658, %v770
        %v772 = vpop.f32.mrf.mxu0
        %v773 = vadd.f32 %v658, %v772
        %774 = vmatmul.bf16.gmra.mxu0 %v620
        %v775 = vpop.f32.mrf.mxu0
        %v776 = vadd.f32 %v658, %v775
        %v777 = vpop.f32.mrf.mxu0
        %v778 = vadd.f32 %v658, %v777
        %779 = vmatmul.bf16.gmra.mxu0 %v622
        %v780 = vpop.f32.mrf.mxu0
        %v781 = vadd.f32 %v658, %v780
        %v782 = vpop.f32.mrf.mxu0
        %v783 = vadd.f32 %v658, %v782
        %784 = vdwg.mxu0
        %785 = vmatpush.bf16.msra.mxu0 %v739
        %786 = vmatpush.bf16.msra.mxu0 %v738
        %787 = vmatpush.bf16.msra.mxu0 %v737
        %788 = vmatpush.bf16.msra.mxu0 %v736
        %789 = vmatpush.bf16.msra.mxu0 %v735
        %790 = vmatpush.bf16.msra.mxu0 %v734
        %791 = vmatpush.bf16.msra.mxu0 %v733
        %792 = vmatpush.bf16.msra.mxu0 %v732
        %793 = vmatmul.bf16.gmra.mxu0 %v617
        %v794 = vpop.f32.mrf.mxu0
        %v795 = vadd.f32 %v766, %v794
        %v796 = vpop.f32.mrf.mxu0
        %v797 = vadd.f32 %v768, %v796
        %798 = vmatmul.bf16.gmra.mxu0 %v619
        %v799 = vpop.f32.mrf.mxu0
        %v800 = vadd.f32 %v771, %v799
        %v801 = vpop.f32.mrf.mxu0
        %v802 = vadd.f32 %v773, %v801
        %803 = vmatmul.bf16.gmra.mxu0 %v621
        %v804 = vpop.f32.mrf.mxu0
        %v805 = vadd.f32 %v776, %v804
        %v806 = vpop.f32.mrf.mxu0
        %v807 = vadd.f32 %v778, %v806
        %808 = vmatmul.bf16.gmra.mxu0 %v623
        %v809 = vpop.f32.mrf.mxu0
        %v810 = vadd.f32 %v781, %v809
        %v811 = vpop.f32.mrf.mxu0
        %v812 = vadd.f32 %v783, %v811
        %813 = vdwg.mxu0
        %v814 = vmax.f32 %v795, 0.0
        %v815 = vmax.f32 %v797, 0.0
        %v816 = vmax.f32 %v800, 0.0
        %v817 = vmax.f32 %v802, 0.0
        %v818 = vmax.f32 %v805, 0.0
        %v819 = vmax.f32 %v807, 0.0
        %v820 = vmax.f32 %v810, 0.0
        %v821 = vmax.f32 %v812, 0.0
        %v822 = vpack.c.bf16 %v815, %v814
        %v823 = vpack.c.bf16 %v817, %v816
        %v824 = vpack.c.bf16 %v819, %v818
        %v825 = vpack.c.bf16 %v821, %v820
        %v826 = vld [vmem:[%s5] sm:$0xf]
        %v827 = vld [vmem:[%s5 + $0x4] sm:$0xf]
        %v828 = vld [vmem:[%s5 + $0x8] sm:$0xf]
        %v829 = vld [vmem:[%s5 + $0xc] sm:$0xf]
        %v830 = vld [vmem:[%s5 + $0x10] sm:$0xf]
        %v831 = vld [vmem:[%s5 + $0x14] sm:$0xf]
        %v832 = vld [vmem:[%s5 + $0x18] sm:$0xf]
        %v833 = vld [vmem:[%s5 + $0x1c] sm:$0xf]
        %v834 = vld [vmem:[%s5 + $0x20] sm:$0xf]
        %v835 = vld [vmem:[%s5 + $0x24] sm:$0xf]
        %v836 = vld [vmem:[%s5 + $0x28] sm:$0xf]
        %v837 = vld [vmem:[%s5 + $0x2c] sm:$0xf]
        %v838 = vld [vmem:[%s5 + $0x30] sm:$0xf]
        %v839 = vld [vmem:[%s5 + $0x34] sm:$0xf]
        %v840 = vld [vmem:[%s5 + $0x38] sm:$0xf]
        %v841 = vld [vmem:[%s5 + $0x3c] sm:$0xf]
        %v842 = vld [vmem:[%s6] sm:$0x1]
        %v844 = vperm.slane %v842, 0
        %v862 = vunpack.c.l.b16 %v826
        %v863 = vunpack.c.l.b16 %v827
        %v864 = vunpack.c.l.b16 %v828
        %v865 = vunpack.c.l.b16 %v829
        %v866 = vunpack.c.l.b16 %v830
        %v867 = vunpack.c.l.b16 %v831
        %v868 = vunpack.c.l.b16 %v832
        %v869 = vunpack.c.l.b16 %v833
        %v870 = vunpack.c.l.b16 %v834
        %v871 = vunpack.c.l.b16 %v835
        %v872 = vunpack.c.l.b16 %v836
        %v873 = vunpack.c.l.b16 %v837
        %v874 = vunpack.c.l.b16 %v838
        %v875 = vunpack.c.l.b16 %v839
        %v876 = vunpack.c.l.b16 %v840
        %v877 = vunpack.c.l.b16 %v841
        %v878 = vpack.c.b16 %v863, %v862
        %v879 = vpack.c.b16 %v865, %v864
        %v880 = vpack.c.b16 %v867, %v866
        %v881 = vpack.c.b16 %v869, %v868
        %v882 = vpack.c.b16 %v871, %v870
        %v883 = vpack.c.b16 %v873, %v872
        %v884 = vpack.c.b16 %v875, %v874
        %v885 = vpack.c.b16 %v877, %v876
        %894 = vmatpush.bf16.msra.mxu0 %v885
        %895 = vmatpush.bf16.msra.mxu0 %v884
        %896 = vmatpush.bf16.msra.mxu0 %v883
        %897 = vmatpush.bf16.msra.mxu0 %v882
        %898 = vmatpush.bf16.msra.mxu0 %v881
        %899 = vmatpush.bf16.msra.mxu0 %v880
        %900 = vmatpush.bf16.msra.mxu0 %v879
        %901 = vmatpush.bf16.msra.mxu0 %v878
        %902 = vmatmul.bf16.gmra.mxu0 %v822
        %v903 = vpop.f32.mrf.mxu0
        %v904 = vadd.f32 %v844, %v903
        %v905 = vpop.f32.mrf.mxu0
        %v906 = vadd.f32 %v844, %v905
        %907 = vmatmul.bf16.gmra.mxu0 %v823
        %v908 = vpop.f32.mrf.mxu0
        %v909 = vadd.f32 %v844, %v908
        %v910 = vpop.f32.mrf.mxu0
        %v911 = vadd.f32 %v844, %v910
        %912 = vmatmul.bf16.gmra.mxu0 %v824
        %v913 = vpop.f32.mrf.mxu0
        %v914 = vadd.f32 %v844, %v913
        %v915 = vpop.f32.mrf.mxu0
        %v916 = vadd.f32 %v844, %v915
        %917 = vmatmul.bf16.gmra.mxu0 %v825
        %v918 = vpop.f32.mrf.mxu0
        %v919 = vadd.f32 %v844, %v918
        %v920 = vpop.f32.mrf.mxu0
        %v921 = vadd.f32 %v844, %v920
        %922 = vdwg.mxu0
        %v923 = vpack.c.bf16 %v904, %v904
        %v924 = vpack.c.bf16 %v906, %v906
        %v925 = vpack.c.bf16 %v909, %v909
        %v926 = vpack.c.bf16 %v911, %v911
        %v927 = vpack.c.bf16 %v914, %v914
        %v928 = vpack.c.bf16 %v916, %v916
        %v929 = vpack.c.bf16 %v919, %v919
        %v930 = vpack.c.bf16 %v921, %v921
        %931 = vst [vmem:[%s274] sm:$0xf] %v923
        %932 = vst [vmem:[%s274 + $0x4] sm:$0xf] %v924
        %933 = vst [vmem:[%s274 + $0x8] sm:$0xf] %v925
        %934 = vst [vmem:[%s274 + $0xc] sm:$0xf] %v926
        %935 = vst [vmem:[%s274 + $0x10] sm:$0xf] %v927
        %936 = vst [vmem:[%s274 + $0x14] sm:$0xf] %v928
        %937 = vst [vmem:[%s274 + $0x18] sm:$0xf] %v929
        %938 = vst [vmem:[%s274 + $0x1c] sm:$0xf] %v930
        %s939 = sand.u32 %s181, 1
        %s940 = scalar_lea.sflag [#allocation3], %s939
        %s941 = sand.u32 %s181, 1
        %s942 = smul.addr %s941, 32
        %s943 = scalar_lea.vmem [#allocation2], %s942
        // Predicated region
        $region49: #{tpu_custom_call.1} parent=47 // pred_check
          %p944 = pneg %p191
        $region50: #{tpu_custom_call.1} parent=47 // pred_check_branch
          %946 = sbr.rel (%p944) target = $region52
        $region51: #{tpu_custom_call.1} parent=47 // pred_region
          %s947 = smul.u32 8, %s21
          %949 = vsyncadd %s940, 0
          %s950 = smul.addr %s947, 4
          %s951 = scalar_lea.hbm %s7, %s950
          %s952 = sshll.u32 %s943, 4
          %s953 = int_to_ptr.vmem [resolvable:$true] %s952
          %s954 = sshll.u32 %s951, 4
          %s955 = int_to_ptr.hbm [resolvable:$true] %s954
          %960 = dma.vmem_to_hbm [thread:$0]  %s953, 512, %s955, %s940, 64, 64, 4
        $region52: #{tpu_custom_call.1} parent=47 // pred_fallthru
          _
      $region48: #{tpu_custom_call.1} parent=5 // pred_fallthru
        _
      %p961 = scmp.le.s32.totalorder 2, %s16
      // Predicated region
      $region53: #{tpu_custom_call.1} parent=5 // pred_check
        %p962 = pneg %p961
      $region54: #{tpu_custom_call.1} parent=5 // pred_check_branch
        %964 = sbr.rel (%p962) target = $region56
      $region55: #{tpu_custom_call.1} parent=5 // pred_region
        %s965 = ssub.s32 %s16, 2
        // Predicated region
        $region57: #{tpu_custom_call.1} parent=55 // pred_check
          %p966 = pneg %p197
        $region58: #{tpu_custom_call.1} parent=55 // pred_check_branch
          %968 = sbr.rel (%p966) target = $region60
        $region59: #{tpu_custom_call.1} parent=55 // pred_region
          %s969 = sand.u32 %s182, 1
          %s970 = scalar_lea.sflag [#allocation3], %s969
          %s971 = sand.u32 %s182, 1
          %s972 = smul.addr %s971, 32
          %s973 = scalar_lea.vmem [#allocation2], %s972
          %975 = dma.done %s970, 512
        $region60: #{tpu_custom_call.1} parent=55 // pred_fallthru
          _
      $region56: #{tpu_custom_call.1} parent=5 // pred_fallthru
        _
    $region6: #{tpu_custom_call.1} parent=1 // loop_footer
      %s20 = sadd.s32 1, %s16
    $region7: #{tpu_custom_call.1} parent=1 // loop_footer_branch
      %15 = sbr.rel target = $region3
    $region8: #{tpu_custom_call.1} parent=1 // loop_exit
      _
    %976 = vsyncpa [#allocation3], 1
    %s977 = scalar_lea.sflag [#allocation3], 1
    %978 = vsyncpa %s977, 1

</llo_original>
